<compile_context>
chip_gen: v6e
topology: v6e:2x2x1
jax: 0.10.0
libtpu: 0.0.40
codegen_flags: <defaults>
</compile_context>

<pallas_src>
import jax
import jax.numpy as jnp
from jax import lax
from jax.experimental import pallas as pl
from jax.experimental.pallas import tpu as pltpu

# Small hyper-parameters consistent with AXform(K1, K2, N, num_branch)
K1 = 32
K2 = 128
N = 16
NUM_BRANCH = 16
M = 2048 // NUM_BRANCH        # 128
B = 2
BN_EPS = 1e-5


def axform_kernel(xb_ref,                      # (1, N, K2)
                  w1_ref, b1_ref,              # (K2, 64), (1, 64)   BN folded
                  w2_ref, b2_ref,              # (64, 128), (1, 128) BN folded
                  w3_ref, b3_ref,              # (128, M), (1, M)
                  w4t_ref, b4t_ref,            # (3, K2), (3, 1)
                  out_ref):                    # (1, 3, M)
    x_base = xb_ref[0]                                               # (N, K2)

    # conv1 (1x1, BN+bias folded) -> relu
    h = jnp.dot(x_base, w1_ref[...], preferred_element_type=jnp.float32) + b1_ref[...]
    h = jnp.maximum(h, 0.0)                                          # (N, 64)

    # conv2 (1x1, BN+bias folded) -> relu
    h = jnp.dot(h, w2_ref[...], preferred_element_type=jnp.float32) + b2_ref[...]
    h = jnp.maximum(h, 0.0)                                          # (N, 128)

    # conv3 (1x1)
    logits = jnp.dot(h, w3_ref[...], preferred_element_type=jnp.float32) + b3_ref[...]  # (N, M)

    # softmax over torch dim=2 of (B, M, N)  ==  over the N axis (axis 0 here)
    mx = jnp.max(logits, axis=0, keepdims=True)
    e = jnp.exp(logits - mx)
    weights = e / jnp.sum(e, axis=0, keepdims=True)                  # (N, M)

    # bmm(x_weights, x_base), computed transposed:
    #   y_T[k, m] = sum_n x_base[n, k] * weights[n, m]  -> (K2, M)
    y_t = lax.dot_general(x_base, weights,
                          dimension_numbers=(((0,), (0,)), ((), ())),
                          preferred_element_type=jnp.float32)        # (K2, M)

    # conv4 (1x1), transposed: (3, K2) @ (K2, M) + (3, 1)  -> (3, M)
    out_t = jnp.dot(w4t_ref[...], y_t,
                    preferred_element_type=jnp.float32) + b4t_ref[...]
    out_ref[0] = out_t                          # lane-dense (3, 128) store


def _param_spec(shape):
    nd = len(shape)
    return pl.BlockSpec(shape, lambda b, _nd=nd: (0,) * _nd)


def axform_pallas(x, params):
    (wfc, bfc, w1, b1, s1, t1, w2, b2, s2, t2, w3, b3, w4, b4) = params

    # --- Hoisted to XLA (trivial FLOPs, fused by the compiler) -------------
    # fc1 + view(-1, N, K2)
    x_base = (x @ wfc + bfc).reshape(B, N, K2)
    # Fold eval-mode BatchNorm + conv bias into the conv weights.
    w1f = w1 * s1
    b1f = b1 * s1 + t1
    w2f = w2 * s2
    b2f = b2 * s2 + t2
    # Transposed conv4 params for a lane-dense kernel output.
    w4t = w4.T                      # (3, K2)
    b4t = b4.reshape(3, 1)          # (3, 1)

    kernel_params = (w1f, b1f, w2f, b2f, w3, b3, w4t, b4t)
    in_specs = [pl.BlockSpec((1, N, K2), lambda b: (b, 0, 0))] + \
               [_param_spec(p.shape) for p in kernel_params]

    out_t = pl.pallas_call(
        axform_kernel,
        out_shape=jax.ShapeDtypeStruct((B, 3, M), jnp.float32),
        grid_spec=pltpu.PrefetchScalarGridSpec(
            num_scalar_prefetch=0,
            grid=(B,),
            in_specs=in_specs,
            out_specs=pl.BlockSpec((1, 3, M), lambda b: (b, 0, 0)),
        ),
        compiler_params=pltpu.CompilerParams(
            dimension_semantics=("parallel",)),
        cost_estimate=pl.CostEstimate(
            flops=3_400_000, transcendentals=B * N * M,
            bytes_accessed=420_000),
    )(x_base, *kernel_params)

    # (B, 3, M) -> (B, M, 3), matching the PyTorch module's output layout.
    return jnp.transpose(out_t, (0, 2, 1))


def init_params(key):
    ks = jax.random.split(key, 18)

    def u(k, shape, fan_in):
        bound = float(fan_in) ** -0.5
        return jax.random.uniform(k, shape, jnp.float32, -bound, bound)

    # Linear / Conv1d(k=1) weights stored as (in_ch, out_ch); biases as (1, C).
    wfc = u(ks[0], (K1, N * K2), K1)
    bfc = u(ks[1], (1, N * K2), K1)
    w1 = u(ks[2], (K2, 64), K2)
    b1 = u(ks[3], (1, 64), K2)
    w2 = u(ks[4], (64, 128), 64)
    b2 = u(ks[5], (1, 128), 64)
    w3 = u(ks[6], (128, M), 128)
    b3 = u(ks[7], (1, M), 128)
    w4 = u(ks[8], (K2, 3), K2)
    b4 = u(ks[9], (1, 3), K2)

    # BatchNorm1d (eval mode): fold (gamma, beta, running_mean, running_var)
    # into scale s and shift t.
    def bn(kg, kb, km, kv, c):
        gamma = 1.0 + 0.1 * jax.random.normal(kg, (1, c), jnp.float32)
        beta = 0.05 * jax.random.normal(kb, (1, c), jnp.float32)
        mean = 0.1 * jax.random.normal(km, (1, c), jnp.float32)
        var = 0.5 + jax.random.uniform(kv, (1, c), jnp.float32, 0.0, 1.0)
        s = gamma * lax.rsqrt(var + BN_EPS)
        t = beta - mean * s
        return s, t

    s1, t1 = bn(ks[10], ks[11], ks[12], ks[13], 64)
    s2, t2 = bn(ks[14], ks[15], ks[16], ks[17], 128)

    return (wfc, bfc, w1, b1, s1, t1, w2, b2, s2, t2, w3, b3, w4, b4)


def axform_ref(x, params):
    """Pure-jnp reference mirroring the PyTorch forward (eval-mode BN)."""
    (wfc, bfc, w1, b1, s1, t1, w2, b2, s2, t2, w3, b3, w4, b4) = params
    flat = x @ wfc + bfc[0]                       # fc1
    x_base = flat.reshape(B, N, K2)               # view(-1, N, K2)
    h = jnp.maximum((x_base @ w1 + b1) * s1 + t1, 0.0)
    h = jnp.maximum((h @ w2 + b2) * s2 + t2, 0.0)
    logits = h @ w3 + b3                          # (B, N, M)
    wsm = jax.nn.softmax(logits, axis=1)          # softmax over N (torch dim=2)
    y = jnp.einsum('bnm,bnk->bmk', wsm, x_base)   # bmm(x_weights, x_base)
    return y @ w4 + b4                            # conv4 -> (B, M, 3)


if __name__ == "__main__":
    key = jax.random.PRNGKey(0)
    kx, kp = jax.random.split(key)
    x = jax.random.normal(kx, (B, K1), jnp.float32)
    params = init_params(kp)

    fwd = jax.jit(axform_pallas)
    out = fwd(x, params)
    out = jax.block_until_ready(out)

    ref = axform_ref(x, params)
    assert out.shape == (B, M, 3), out.shape
    err = float(jnp.max(jnp.abs(out - ref)))
    assert err < 1e-3, f"max abs err too large: {err}"
    print("KERNEL_OK")
</pallas_src>

<mosaic_0001>
module attributes {stable_mosaic.version = 11 : i64} {
  func.func @axform_kernel(%arg0: i32, %arg1: memref<1x16x128xf32, #tpu.memory_space<vmem>>, %arg2: memref<128x64xf32, #tpu.memory_space<vmem>>, %arg3: memref<1x64xf32, #tpu.memory_space<vmem>>, %arg4: memref<64x128xf32, #tpu.memory_space<vmem>>, %arg5: memref<1x128xf32, #tpu.memory_space<vmem>>, %arg6: memref<128x128xf32, #tpu.memory_space<vmem>>, %arg7: memref<1x128xf32, #tpu.memory_space<vmem>>, %arg8: memref<3x128xf32, #tpu.memory_space<vmem>>, %arg9: memref<3x1xf32, #tpu.memory_space<vmem>>, %arg10: memref<1x3x128xf32, #tpu.memory_space<vmem>>) attributes {dimension_semantics = [#tpu.dimension_semantics<parallel>], iteration_bounds = array<i64: 2>, scalar_prefetch = 0 : i64, scratch_operands = 0 : i64, tpu.core_type = #tpu.core_type<tc>, window_params = [{transform_indices = @transform_0, window_bounds = array<i64: 1, 16, 128>}, {pipeline_mode = #tpu.pipeline_mode<synchronous>, transform_indices = @transform_1, window_bounds = array<i64: 128, 64>}, {pipeline_mode = #tpu.pipeline_mode<synchronous>, transform_indices = @transform_2, window_bounds = array<i64: 1, 64>}, {pipeline_mode = #tpu.pipeline_mode<synchronous>, transform_indices = @transform_3, window_bounds = array<i64: 64, 128>}, {pipeline_mode = #tpu.pipeline_mode<synchronous>, transform_indices = @transform_4, window_bounds = array<i64: 1, 128>}, {pipeline_mode = #tpu.pipeline_mode<synchronous>, transform_indices = @transform_5, window_bounds = array<i64: 128, 128>}, {pipeline_mode = #tpu.pipeline_mode<synchronous>, transform_indices = @transform_6, window_bounds = array<i64: 1, 128>}, {pipeline_mode = #tpu.pipeline_mode<synchronous>, transform_indices = @transform_7, window_bounds = array<i64: 3, 128>}, {pipeline_mode = #tpu.pipeline_mode<synchronous>, transform_indices = @transform_8, window_bounds = array<i64: 3, 1>}, {transform_indices = @transform_9, window_bounds = array<i64: 1, 3, 128>}]} {
    %c0 = arith.constant 0 : index
    %c0_0 = arith.constant 0 : index
    %c0_1 = arith.constant 0 : index
    %0 = vector.load %arg1[%c0, %c0_0, %c0_1] : memref<1x16x128xf32, #tpu.memory_space<vmem>>, vector<1x16x128xf32>
    %1 = vector.shape_cast %0 : vector<1x16x128xf32> to vector<16x128xf32>
    %c0_2 = arith.constant 0 : index
    %c0_3 = arith.constant 0 : index
    %2 = vector.load %arg2[%c0_2, %c0_3] : memref<128x64xf32, #tpu.memory_space<vmem>>, vector<128x64xf32>
    %cst = arith.constant dense<0.000000e+00> : vector<16x64xf32>
    %3 = tpu.matmul %1, %2, %cst {dimension_numbers = #tpu.dot_dimension_numbers<[1], [0], [0], [1], [0, 0, 1, 1], [], []>} : vector<16x128xf32>, vector<128x64xf32>, vector<16x64xf32> -> vector<16x64xf32>
    %c0_4 = arith.constant 0 : index
    %c0_5 = arith.constant 0 : index
    %4 = vector.load %arg3[%c0_4, %c0_5] : memref<1x64xf32, #tpu.memory_space<vmem>>, vector<1x64xf32>
    %5 = vector.broadcast %4 : vector<1x64xf32> to vector<16x64xf32>
    %6 = arith.addf %3, %5 : vector<16x64xf32>
    %cst_6 = arith.constant 0.000000e+00 : f32
    %7 = vector.broadcast %cst_6 : f32 to vector<16x64xf32>
    %8 = arith.maximumf %6, %7 : vector<16x64xf32>
    %c0_7 = arith.constant 0 : index
    %c0_8 = arith.constant 0 : index
    %9 = vector.load %arg4[%c0_7, %c0_8] : memref<64x128xf32, #tpu.memory_space<vmem>>, vector<64x128xf32>
    %cst_9 = arith.constant dense<0.000000e+00> : vector<16x128xf32>
    %10 = tpu.matmul %8, %9, %cst_9 {dimension_numbers = #tpu.dot_dimension_numbers<[1], [0], [0], [1], [0, 0, 1, 1], [], []>} : vector<16x64xf32>, vector<64x128xf32>, vector<16x128xf32> -> vector<16x128xf32>
    %c0_10 = arith.constant 0 : index
    %c0_11 = arith.constant 0 : index
    %11 = vector.load %arg5[%c0_10, %c0_11] : memref<1x128xf32, #tpu.memory_space<vmem>>, vector<1x128xf32>
    %12 = vector.broadcast %11 : vector<1x128xf32> to vector<16x128xf32>
    %13 = arith.addf %10, %12 : vector<16x128xf32>
    %cst_12 = arith.constant 0.000000e+00 : f32
    %14 = vector.broadcast %cst_12 : f32 to vector<16x128xf32>
    %15 = arith.maximumf %13, %14 : vector<16x128xf32>
    %c0_13 = arith.constant 0 : index
    %c0_14 = arith.constant 0 : index
    %16 = vector.load %arg6[%c0_13, %c0_14] : memref<128x128xf32, #tpu.memory_space<vmem>>, vector<128x128xf32>
    %cst_15 = arith.constant dense<0.000000e+00> : vector<16x128xf32>
    %17 = tpu.matmul %15, %16, %cst_15 {dimension_numbers = #tpu.dot_dimension_numbers<[1], [0], [0], [1], [0, 0, 1, 1], [], []>} : vector<16x128xf32>, vector<128x128xf32>, vector<16x128xf32> -> vector<16x128xf32>
    %c0_16 = arith.constant 0 : index
    %c0_17 = arith.constant 0 : index
    %18 = vector.load %arg7[%c0_16, %c0_17] : memref<1x128xf32, #tpu.memory_space<vmem>>, vector<1x128xf32>
    %19 = vector.broadcast %18 : vector<1x128xf32> to vector<16x128xf32>
    %20 = arith.addf %17, %19 : vector<16x128xf32>
    %cst_18 = arith.constant dense<0xFF800000> : vector<128xf32>
    %21 = vector.multi_reduction <maximumf>, %20, %cst_18 [0] : vector<16x128xf32> to vector<128xf32>
    %22 = vector.shape_cast %21 : vector<128xf32> to vector<1x128xf32>
    %23 = vector.broadcast %22 : vector<1x128xf32> to vector<16x128xf32>
    %24 = arith.subf %20, %23 : vector<16x128xf32>
    %25 = math.exp %24 : vector<16x128xf32>
    %cst_19 = arith.constant dense<0.000000e+00> : vector<128xf32>
    %26 = vector.multi_reduction <add>, %25, %cst_19 [0] : vector<16x128xf32> to vector<128xf32>
    %27 = vector.shape_cast %26 : vector<128xf32> to vector<1x128xf32>
    %28 = vector.broadcast %27 : vector<1x128xf32> to vector<16x128xf32>
    %29 = arith.divf %25, %28 : vector<16x128xf32>
    %cst_20 = arith.constant dense<0.000000e+00> : vector<128x128xf32>
    %30 = tpu.matmul %1, %29, %cst_20 {dimension_numbers = #tpu.dot_dimension_numbers<[0], [0], [1], [1], [0, 1, 1, 1], [], []>} : vector<16x128xf32>, vector<16x128xf32>, vector<128x128xf32> -> vector<128x128xf32>
    %c0_21 = arith.constant 0 : index
    %c0_22 = arith.constant 0 : index
    %31 = vector.load %arg8[%c0_21, %c0_22] : memref<3x128xf32, #tpu.memory_space<vmem>>, vector<3x128xf32>
    %cst_23 = arith.constant dense<0.000000e+00> : vector<3x128xf32>
    %32 = tpu.matmul %31, %30, %cst_23 {dimension_numbers = #tpu.dot_dimension_numbers<[1], [0], [0], [1], [0, 0, 1, 1], [], []>} : vector<3x128xf32>, vector<128x128xf32>, vector<3x128xf32> -> vector<3x128xf32>
    %c0_24 = arith.constant 0 : index
    %c0_25 = arith.constant 0 : index
    %33 = vector.load %arg9[%c0_24, %c0_25] : memref<3x1xf32, #tpu.memory_space<vmem>>, vector<3x1xf32>
    %34 = vector.broadcast %33 : vector<3x1xf32> to vector<3x128xf32>
    %35 = arith.addf %32, %34 : vector<3x128xf32>
    %c0_26 = arith.constant 0 : index
    %c0_27 = arith.constant 0 : index
    %c0_28 = arith.constant 0 : index
    %36 = vector.load %arg10[%c0_26, %c0_27, %c0_28] : memref<1x3x128xf32, #tpu.memory_space<vmem>>, vector<1x3x128xf32>
    %37 = vector.shape_cast %36 : vector<1x3x128xf32> to vector<3x128xf32>
    %38 = vector.shape_cast %35 : vector<3x128xf32> to vector<1x3x128xf32>
    tpu.vector_store %arg10[%c0_26, %c0_27, %c0_28], %38 {strides = array<i32>} : memref<1x3x128xf32, #tpu.memory_space<vmem>>, vector<1x3x128xf32>,
    return
  }
  func.func @transform_0(%arg0: i32) -> (i32, i32, i32) {
    %c0_i32 = arith.constant 0 : i32
    %c0_i32_0 = arith.constant 0 : i32
    %c0_i32_1 = arith.constant 0 : i32
    return %arg0, %c0_i32, %c0_i32_0 : i32, i32, i32
  }
  func.func @transform_1(%arg0: i32) -> (i32, i32) {
    %c0_i32 = arith.constant 0 : i32
    %c0_i32_0 = arith.constant 0 : i32
    %c0_i32_1 = arith.constant 0 : i32
    return %c0_i32, %c0_i32_0 : i32, i32
  }
  func.func @transform_2(%arg0: i32) -> (i32, i32) {
    %c0_i32 = arith.constant 0 : i32
    %c0_i32_0 = arith.constant 0 : i32
    %c0_i32_1 = arith.constant 0 : i32
    return %c0_i32, %c0_i32_0 : i32, i32
  }
  func.func @transform_3(%arg0: i32) -> (i32, i32) {
    %c0_i32 = arith.constant 0 : i32
    %c0_i32_0 = arith.constant 0 : i32
    %c0_i32_1 = arith.constant 0 : i32
    return %c0_i32, %c0_i32_0 : i32, i32
  }
  func.func @transform_4(%arg0: i32) -> (i32, i32) {
    %c0_i32 = arith.constant 0 : i32
    %c0_i32_0 = arith.constant 0 : i32
    %c0_i32_1 = arith.constant 0 : i32
    return %c0_i32, %c0_i32_0 : i32, i32
  }
  func.func @transform_5(%arg0: i32) -> (i32, i32) {
    %c0_i32 = arith.constant 0 : i32
    %c0_i32_0 = arith.constant 0 : i32
    %c0_i32_1 = arith.constant 0 : i32
    return %c0_i32, %c0_i32_0 : i32, i32
  }
  func.func @transform_6(%arg0: i32) -> (i32, i32) {
    %c0_i32 = arith.constant 0 : i32
    %c0_i32_0 = arith.constant 0 : i32
    %c0_i32_1 = arith.constant 0 : i32
    return %c0_i32, %c0_i32_0 : i32, i32
  }
  func.func @transform_7(%arg0: i32) -> (i32, i32) {
    %c0_i32 = arith.constant 0 : i32
    %c0_i32_0 = arith.constant 0 : i32
    %c0_i32_1 = arith.constant 0 : i32
    return %c0_i32, %c0_i32_0 : i32, i32
  }
  func.func @transform_8(%arg0: i32) -> (i32, i32) {
    %c0_i32 = arith.constant 0 : i32
    %c0_i32_0 = arith.constant 0 : i32
    %c0_i32_1 = arith.constant 0 : i32
    return %c0_i32, %c0_i32_0 : i32, i32
  }
  func.func @transform_9(%arg0: i32) -> (i32, i32, i32) {
    %c0_i32 = arith.constant 0 : i32
    %c0_i32_0 = arith.constant 0 : i32
    %c0_i32_1 = arith.constant 0 : i32
    return %arg0, %c0_i32, %c0_i32_0 : i32, i32, i32
  }
}

</mosaic_0001>

<llo_original>
// kernel: axform_pallas.1
$region0: #{axform_pallas.1}
  #allocation0 [shape = 'u32[]', space=smem, size = 0x4, offset = 0x4, fixed_abs, tag = 'smem constant byte address 0x4 - core index']
  #allocation1 [shape = 'u32[144,128]{1,0:T(1,128)}', space=vmem, size = 0x12000, scoped, tag = 'internal scratch']
  %s0 = inlined_call_operand.vmem [shape: f32[2,16,128], index: 0, kind: input, shape index: {}]
  %s1 = inlined_call_operand.vmem [shape: f32[128,64], index: 1, kind: input, shape index: {}]
  %s2 = inlined_call_operand.vmem [shape: f32[1,64], index: 2, kind: input, shape index: {}]
  %s3 = inlined_call_operand.vmem [shape: f32[64,128], index: 3, kind: input, shape index: {}]
  %s4 = inlined_call_operand.vmem [shape: f32[1,128], index: 4, kind: input, shape index: {}]
  %s5 = inlined_call_operand.vmem [shape: f32[128,128], index: 5, kind: input, shape index: {}]
  %s6 = inlined_call_operand.vmem [shape: f32[1,128], index: 6, kind: input, shape index: {}]
  %s7 = inlined_call_operand.vmem [shape: f32[3,128], index: 7, kind: input, shape index: {}]
  %s8 = inlined_call_operand.vmem [shape: f32[3,1], index: 8, kind: input, shape index: {}]
  %s9 = inlined_call_operand.vmem [shape: f32[2,3,128], index: 9, kind: output, shape index: {}]
  %s10 = sld [smem:[#allocation0]]
  $region69: #{axform_pallas.1} parent=0
    _
  %s12 = ssub.s32 1, %s10
  %s13 = scalar_select 0, %s12, %s10
  loop: start=0, step=1, limit=4
  $region2: #{axform_pallas.1} parent=0 // loop_pre_header
    _
  $region3: #{axform_pallas.1} parent=0 // loop_header
    %s15 = sphi 0, %s19
    %p16 = scmp.ge.s32.totalorder %s15, 4
    %s25 = sphi 0, %s27
    %s28 = sphi 0, %s25
    %s29 = sphi 0, %s28
    %s45 = sphi 0, %s29
    %s49 = sphi 0, %s49
    %s51 = sphi 0, %s49
    %s52 = sphi 0, %s51
    %s66 = sphi 0, %s52
    %s70 = sphi 0, %s70
    %s72 = sphi 0, %s70
    %s73 = sphi 0, %s72
    %s87 = sphi 0, %s73
    %s91 = sphi 0, %s91
    %s93 = sphi 0, %s91
    %s94 = sphi 0, %s93
    %s108 = sphi 0, %s94
    %s112 = sphi 0, %s112
    %s114 = sphi 0, %s112
    %s115 = sphi 0, %s114
    %s129 = sphi 0, %s115
    %s133 = sphi 0, %s133
    %s135 = sphi 0, %s133
    %s136 = sphi 0, %s135
    %s150 = sphi 0, %s136
    %s154 = sphi 0, %s154
    %s156 = sphi 0, %s154
    %s157 = sphi 0, %s156
    %s171 = sphi 0, %s157
    %s175 = sphi 0, %s175
    %s177 = sphi 0, %s175
    %s178 = sphi 0, %s177
    %s192 = sphi 0, %s178
    %s196 = sphi 0, %s196
    %s198 = sphi 0, %s196
    %s199 = sphi 0, %s198
    %s213 = sphi 0, %s199
    %s219 = sphi 0, %s221
    %s222 = sphi 0, %s219
    %s223 = sphi 0, %s222
    %s239 = sphi 0, %s223
  $region4: #{axform_pallas.1} parent=0 // loop_header_branch
    %18 = sbr.rel (%p16) target = $region8
  $region5: #{axform_pallas.1} parent=0 // loop_body
    %s20 = ssub.s32 %s15, 1
    %s21 = ssub.s32 %s15, 2
    %s22 = sadd.s32 %s15, 1
    %s23 = ssub.s32 %s15, %s22
    %p24 = scmp.eq.s32.totalorder %s23, 0
    %s26 = sadd.s32 %s25, 1
    %s27 = scalar_select %p24, %s25, %s26
    %p30 = pneg %p24
    %p31 = scmp.eq.s32.totalorder %s15, 1
    %p32 = por %p30, %p31
    %p33 = scmp.ne.s32.totalorder %s25, %s28
    %p34 = scmp.eq.s32.totalorder %s15, 0
    %p35 = por %p33, %p34
    %p36 = scmp.ne.s32.totalorder %s25, %s28
    %p37 = scmp.eq.s32.totalorder %s20, 1
    %p38 = por %p36, %p37
    %p39 = scmp.ne.s32.totalorder %s28, %s29
    %p40 = scmp.eq.s32.totalorder %s20, 0
    %p41 = por %p39, %p40
    %p42 = scmp.ne.s32.totalorder %s28, %s29
    %p43 = scmp.eq.s32.totalorder %s21, 1
    %p44 = por %p42, %p43
    %p46 = scmp.ne.s32.totalorder %s29, %s45
    %p47 = scmp.eq.s32.totalorder %s21, 0
    %p48 = por %p46, %p47
    %s50 = sadd.s32 %s49, 1
    %p53 = scmp.eq.s32.totalorder %s15, 1
    %p54 = scmp.ne.s32.totalorder %s49, %s51
    %p55 = scmp.eq.s32.totalorder %s15, 0
    %p56 = por %p54, %p55
    %p57 = scmp.ne.s32.totalorder %s49, %s51
    %p58 = scmp.eq.s32.totalorder %s20, 1
    %p59 = por %p57, %p58
    %p60 = scmp.ne.s32.totalorder %s51, %s52
    %p61 = scmp.eq.s32.totalorder %s20, 0
    %p62 = por %p60, %p61
    %p63 = scmp.ne.s32.totalorder %s51, %s52
    %p64 = scmp.eq.s32.totalorder %s21, 1
    %p65 = por %p63, %p64
    %p67 = scmp.ne.s32.totalorder %s52, %s66
    %p68 = scmp.eq.s32.totalorder %s21, 0
    %p69 = por %p67, %p68
    %s71 = sadd.s32 %s70, 1
    %p74 = scmp.eq.s32.totalorder %s15, 1
    %p75 = scmp.ne.s32.totalorder %s70, %s72
    %p76 = scmp.eq.s32.totalorder %s15, 0
    %p77 = por %p75, %p76
    %p78 = scmp.ne.s32.totalorder %s70, %s72
    %p79 = scmp.eq.s32.totalorder %s20, 1
    %p80 = por %p78, %p79
    %p81 = scmp.ne.s32.totalorder %s72, %s73
    %p82 = scmp.eq.s32.totalorder %s20, 0
    %p83 = por %p81, %p82
    %p84 = scmp.ne.s32.totalorder %s72, %s73
    %p85 = scmp.eq.s32.totalorder %s21, 1
    %p86 = por %p84, %p85
    %p88 = scmp.ne.s32.totalorder %s73, %s87
    %p89 = scmp.eq.s32.totalorder %s21, 0
    %p90 = por %p88, %p89
    %s92 = sadd.s32 %s91, 1
    %p95 = scmp.eq.s32.totalorder %s15, 1
    %p96 = scmp.ne.s32.totalorder %s91, %s93
    %p97 = scmp.eq.s32.totalorder %s15, 0
    %p98 = por %p96, %p97
    %p99 = scmp.ne.s32.totalorder %s91, %s93
    %p100 = scmp.eq.s32.totalorder %s20, 1
    %p101 = por %p99, %p100
    %p102 = scmp.ne.s32.totalorder %s93, %s94
    %p103 = scmp.eq.s32.totalorder %s20, 0
    %p104 = por %p102, %p103
    %p105 = scmp.ne.s32.totalorder %s93, %s94
    %p106 = scmp.eq.s32.totalorder %s21, 1
    %p107 = por %p105, %p106
    %p109 = scmp.ne.s32.totalorder %s94, %s108
    %p110 = scmp.eq.s32.totalorder %s21, 0
    %p111 = por %p109, %p110
    %s113 = sadd.s32 %s112, 1
    %p116 = scmp.eq.s32.totalorder %s15, 1
    %p117 = scmp.ne.s32.totalorder %s112, %s114
    %p118 = scmp.eq.s32.totalorder %s15, 0
    %p119 = por %p117, %p118
    %p120 = scmp.ne.s32.totalorder %s112, %s114
    %p121 = scmp.eq.s32.totalorder %s20, 1
    %p122 = por %p120, %p121
    %p123 = scmp.ne.s32.totalorder %s114, %s115
    %p124 = scmp.eq.s32.totalorder %s20, 0
    %p125 = por %p123, %p124
    %p126 = scmp.ne.s32.totalorder %s114, %s115
    %p127 = scmp.eq.s32.totalorder %s21, 1
    %p128 = por %p126, %p127
    %p130 = scmp.ne.s32.totalorder %s115, %s129
    %p131 = scmp.eq.s32.totalorder %s21, 0
    %p132 = por %p130, %p131
    %s134 = sadd.s32 %s133, 1
    %p137 = scmp.eq.s32.totalorder %s15, 1
    %p138 = scmp.ne.s32.totalorder %s133, %s135
    %p139 = scmp.eq.s32.totalorder %s15, 0
    %p140 = por %p138, %p139
    %p141 = scmp.ne.s32.totalorder %s133, %s135
    %p142 = scmp.eq.s32.totalorder %s20, 1
    %p143 = por %p141, %p142
    %p144 = scmp.ne.s32.totalorder %s135, %s136
    %p145 = scmp.eq.s32.totalorder %s20, 0
    %p146 = por %p144, %p145
    %p147 = scmp.ne.s32.totalorder %s135, %s136
    %p148 = scmp.eq.s32.totalorder %s21, 1
    %p149 = por %p147, %p148
    %p151 = scmp.ne.s32.totalorder %s136, %s150
    %p152 = scmp.eq.s32.totalorder %s21, 0
    %p153 = por %p151, %p152
    %s155 = sadd.s32 %s154, 1
    %p158 = scmp.eq.s32.totalorder %s15, 1
    %p159 = scmp.ne.s32.totalorder %s154, %s156
    %p160 = scmp.eq.s32.totalorder %s15, 0
    %p161 = por %p159, %p160
    %p162 = scmp.ne.s32.totalorder %s154, %s156
    %p163 = scmp.eq.s32.totalorder %s20, 1
    %p164 = por %p162, %p163
    %p165 = scmp.ne.s32.totalorder %s156, %s157
    %p166 = scmp.eq.s32.totalorder %s20, 0
    %p167 = por %p165, %p166
    %p168 = scmp.ne.s32.totalorder %s156, %s157
    %p169 = scmp.eq.s32.totalorder %s21, 1
    %p170 = por %p168, %p169
    %p172 = scmp.ne.s32.totalorder %s157, %s171
    %p173 = scmp.eq.s32.totalorder %s21, 0
    %p174 = por %p172, %p173
    %s176 = sadd.s32 %s175, 1
    %p179 = scmp.eq.s32.totalorder %s15, 1
    %p180 = scmp.ne.s32.totalorder %s175, %s177
    %p181 = scmp.eq.s32.totalorder %s15, 0
    %p182 = por %p180, %p181
    %p183 = scmp.ne.s32.totalorder %s175, %s177
    %p184 = scmp.eq.s32.totalorder %s20, 1
    %p185 = por %p183, %p184
    %p186 = scmp.ne.s32.totalorder %s177, %s178
    %p187 = scmp.eq.s32.totalorder %s20, 0
    %p188 = por %p186, %p187
    %p189 = scmp.ne.s32.totalorder %s177, %s178
    %p190 = scmp.eq.s32.totalorder %s21, 1
    %p191 = por %p189, %p190
    %p193 = scmp.ne.s32.totalorder %s178, %s192
    %p194 = scmp.eq.s32.totalorder %s21, 0
    %p195 = por %p193, %p194
    %s197 = sadd.s32 %s196, 1
    %p200 = scmp.eq.s32.totalorder %s15, 1
    %p201 = scmp.ne.s32.totalorder %s196, %s198
    %p202 = scmp.eq.s32.totalorder %s15, 0
    %p203 = por %p201, %p202
    %p204 = scmp.ne.s32.totalorder %s196, %s198
    %p205 = scmp.eq.s32.totalorder %s20, 1
    %p206 = por %p204, %p205
    %p207 = scmp.ne.s32.totalorder %s198, %s199
    %p208 = scmp.eq.s32.totalorder %s20, 0
    %p209 = por %p207, %p208
    %p210 = scmp.ne.s32.totalorder %s198, %s199
    %p211 = scmp.eq.s32.totalorder %s21, 1
    %p212 = por %p210, %p211
    %p214 = scmp.ne.s32.totalorder %s199, %s213
    %p215 = scmp.eq.s32.totalorder %s21, 0
    %p216 = por %p214, %p215
    %s217 = ssub.s32 %s15, %s22
    %p218 = scmp.eq.s32.totalorder %s217, 0
    %s220 = sadd.s32 %s219, 1
    %s221 = scalar_select %p218, %s219, %s220
    %p224 = pneg %p218
    %p225 = scmp.eq.s32.totalorder %s15, 1
    %p226 = por %p224, %p225
    %p227 = scmp.ne.s32.totalorder %s219, %s222
    %p228 = scmp.eq.s32.totalorder %s15, 0
    %p229 = por %p227, %p228
    %p230 = scmp.ne.s32.totalorder %s219, %s222
    %p231 = scmp.eq.s32.totalorder %s20, 1
    %p232 = por %p230, %p231
    %p233 = scmp.ne.s32.totalorder %s222, %s223
    %p234 = scmp.eq.s32.totalorder %s20, 0
    %p235 = por %p233, %p234
    %p236 = scmp.ne.s32.totalorder %s222, %s223
    %p237 = scmp.eq.s32.totalorder %s21, 1
    %p238 = por %p236, %p237
    %p240 = scmp.ne.s32.totalorder %s223, %s239
    %p241 = scmp.eq.s32.totalorder %s21, 0
    %p242 = por %p240, %p241
    %p243 = scmp.le.s32.totalorder 1, %s15
    %p244 = scmp.lt.s32.totalorder %s15, 3
    %p245 = pnand %p243, %p244
    %p246 = pneg %p245
    // Predicated region
    $region9: #{axform_pallas.1} parent=5 // pred_check
      _
    $region10: #{axform_pallas.1} parent=5 // pred_check_branch
      %248 = sbr.rel (%p245) target = $region12
    $region11: #{axform_pallas.1} parent=5 // pred_region
      %s249 = ssub.s32 %s15, 1
      // Predicated region
      $region13: #{axform_pallas.1} parent=11 // pred_check
        %p250 = pneg %p62
      $region14: #{axform_pallas.1} parent=11 // pred_check_branch
        %252 = sbr.rel (%p250) target = $region16
      $region15: #{axform_pallas.1} parent=11 // pred_region
        _
      $region16: #{axform_pallas.1} parent=11 // pred_fallthru
        _
      // Predicated region
      $region17: #{axform_pallas.1} parent=11 // pred_check
        %p253 = pneg %p83
      $region18: #{axform_pallas.1} parent=11 // pred_check_branch
        %255 = sbr.rel (%p253) target = $region20
      $region19: #{axform_pallas.1} parent=11 // pred_region
        _
      $region20: #{axform_pallas.1} parent=11 // pred_fallthru
        _
      // Predicated region
      $region21: #{axform_pallas.1} parent=11 // pred_check
        %p256 = pneg %p104
      $region22: #{axform_pallas.1} parent=11 // pred_check_branch
        %258 = sbr.rel (%p256) target = $region24
      $region23: #{axform_pallas.1} parent=11 // pred_region
        _
      $region24: #{axform_pallas.1} parent=11 // pred_fallthru
        _
      // Predicated region
      $region25: #{axform_pallas.1} parent=11 // pred_check
        %p259 = pneg %p125
      $region26: #{axform_pallas.1} parent=11 // pred_check_branch
        %261 = sbr.rel (%p259) target = $region28
      $region27: #{axform_pallas.1} parent=11 // pred_region
        _
      $region28: #{axform_pallas.1} parent=11 // pred_fallthru
        _
      // Predicated region
      $region29: #{axform_pallas.1} parent=11 // pred_check
        %p262 = pneg %p146
      $region30: #{axform_pallas.1} parent=11 // pred_check_branch
        %264 = sbr.rel (%p262) target = $region32
      $region31: #{axform_pallas.1} parent=11 // pred_region
        _
      $region32: #{axform_pallas.1} parent=11 // pred_fallthru
        _
      // Predicated region
      $region33: #{axform_pallas.1} parent=11 // pred_check
        %p265 = pneg %p167
      $region34: #{axform_pallas.1} parent=11 // pred_check_branch
        %267 = sbr.rel (%p265) target = $region36
      $region35: #{axform_pallas.1} parent=11 // pred_region
        _
      $region36: #{axform_pallas.1} parent=11 // pred_fallthru
        _
      // Predicated region
      $region37: #{axform_pallas.1} parent=11 // pred_check
        %p268 = pneg %p188
      $region38: #{axform_pallas.1} parent=11 // pred_check_branch
        %270 = sbr.rel (%p268) target = $region40
      $region39: #{axform_pallas.1} parent=11 // pred_region
        _
      $region40: #{axform_pallas.1} parent=11 // pred_fallthru
        _
      // Predicated region
      $region41: #{axform_pallas.1} parent=11 // pred_check
        %p271 = pneg %p209
      $region42: #{axform_pallas.1} parent=11 // pred_check_branch
        %273 = sbr.rel (%p271) target = $region44
      $region43: #{axform_pallas.1} parent=11 // pred_region
        _
      $region44: #{axform_pallas.1} parent=11 // pred_fallthru
        _
    $region12: #{axform_pallas.1} parent=5 // pred_fallthru
      _
    %p274 = scmp.lt.s32.totalorder %s15, 2
    // Predicated region
    $region45: #{axform_pallas.1} parent=5 // pred_check
      %p275 = pneg %p274
    $region46: #{axform_pallas.1} parent=5 // pred_check_branch
      %277 = sbr.rel (%p275) target = $region48
    $region47: #{axform_pallas.1} parent=5 // pred_region
      // Predicated region
      $region49: #{axform_pallas.1} parent=47 // pred_check
        %p278 = pneg %p35
      $region50: #{axform_pallas.1} parent=47 // pred_check_branch
        %280 = sbr.rel (%p278) target = $region52
      $region51: #{axform_pallas.1} parent=47 // pred_region
        %p281 = scmp.lt.s32.totalorder %s15, 1
        %s282 = scalar_select %p281, %s15, 1
        %s283 = smul.addr %s282, 2
        %s284 = smul.addr %s283, 8
        %s285 = scalar_lea.vmem %s0, %s284
      $region52: #{axform_pallas.1} parent=47 // pred_fallthru
        _
    $region48: #{axform_pallas.1} parent=5 // pred_fallthru
      _
    %p286 = scmp.le.s32.totalorder 1, %s15
    %p287 = scmp.lt.s32.totalorder %s15, 3
    %p288 = pnand %p286, %p287
    %p289 = pneg %p288
    // Predicated region
    $region53: #{axform_pallas.1} parent=5 // pred_check
      _
    $region54: #{axform_pallas.1} parent=5 // pred_check_branch
      %291 = sbr.rel (%p288) target = $region56
    $region55: #{axform_pallas.1} parent=5 // pred_region
      %s292 = ssub.s32 %s15, 1
      %p293 = scmp.lt.s32.totalorder %s20, 1
      %s294 = scalar_select %p293, %s20, 1
      %s295 = smul.addr %s294, 2
      %s296 = smul.addr %s295, 8
      %s297 = scalar_lea.vmem %s0, %s296
      %p298 = pneg %p41
      %p299 = pneg %p38
      %p300 = pneg %p62
      %p301 = pneg %p59
      %p302 = pneg %p83
      %p303 = pneg %p80
      %p304 = pneg %p104
      %p305 = pneg %p101
      %p306 = pneg %p125
      %p307 = pneg %p122
      %p308 = pneg %p146
      %p309 = pneg %p143
      %p310 = pneg %p167
      %p311 = pneg %p164
      %p312 = pneg %p188
      %p313 = pneg %p185
      %p314 = pneg %p209
      %p315 = pneg %p206
      %p316 = pneg %p235
      %p317 = pneg %p232
      %p318 = scmp.lt.s32.totalorder %s20, 1
      %s319 = scalar_select %p318, %s20, 1
      %s320 = smul.addr %s319, 4
      %s321 = scalar_lea.vmem %s9, %s320
      %p322 = scmp.lt.s32.totalorder %s20, 1
      %s323 = scalar_select %p322, %s20, 1
      %s324 = smul.addr %s323, 2
      %s325 = smul.addr %s324, 8
      %s326 = scalar_lea.vmem %s0, %s325
      %p327 = scmp.lt.s32.totalorder %s20, 1
      %s328 = scalar_select %p327, %s20, 1
      %s329 = smul.addr %s328, 4
      %s330 = scalar_lea.vmem %s9, %s329
      %v331 = vld [vmem:[%s326] sm:$0xff]
      %v332 = vld [vmem:[%s326 + $0x8] sm:$0xff]
      %v333 = vld [vmem:[%s1] sm:$0xff]
      %v334 = vld [vmem:[%s1 + $0x8] sm:$0xff]
      %v335 = vld [vmem:[%s1 + $0x10] sm:$0xff]
      %v336 = vld [vmem:[%s1 + $0x18] sm:$0xff]
      %v337 = vld [vmem:[%s1 + $0x20] sm:$0xff]
      %v338 = vld [vmem:[%s1 + $0x28] sm:$0xff]
      %v339 = vld [vmem:[%s1 + $0x30] sm:$0xff]
      %v340 = vld [vmem:[%s1 + $0x38] sm:$0xff]
      %v341 = vld [vmem:[%s1 + $0x40] sm:$0xff]
      %v342 = vld [vmem:[%s1 + $0x48] sm:$0xff]
      %v343 = vld [vmem:[%s1 + $0x50] sm:$0xff]
      %v344 = vld [vmem:[%s1 + $0x58] sm:$0xff]
      %v345 = vld [vmem:[%s1 + $0x60] sm:$0xff]
      %v346 = vld [vmem:[%s1 + $0x68] sm:$0xff]
      %v347 = vld [vmem:[%s1 + $0x70] sm:$0xff]
      %v348 = vld [vmem:[%s1 + $0x78] sm:$0xff]
      %v349 = vld [vmem:[%s2] sm:$0x1]
      %v351 = vlaneseq
      %v352 = vshrl.u32 %v351, 7
      %v353 = vsub.s32 0, %v352
      %v354 = vrot.slane %v349, %v353
      %356 = vmatprep.subr.mxu0 0.0
      %357 = vmatpush1.msra.mxu0 %v348
      %358 = vmatprep.subr.mxu0 0.0
      %359 = vmatpush1.msra.mxu0 %v347
      %360 = vmatprep.subr.mxu0 0.0
      %361 = vmatpush1.msra.mxu0 %v346
      %362 = vmatprep.subr.mxu0 0.0
      %363 = vmatpush1.msra.mxu0 %v345
      %364 = vmatprep.subr.mxu0 0.0
      %365 = vmatpush1.msra.mxu0 %v344
      %366 = vmatprep.subr.mxu0 0.0
      %367 = vmatpush1.msra.mxu0 %v343
      %368 = vmatprep.subr.mxu0 0.0
      %369 = vmatpush1.msra.mxu0 %v342
      %370 = vmatprep.subr.mxu0 0.0
      %371 = vmatpush1.msra.mxu0 %v341
      %372 = vmatprep.subr.mxu0 0.0
      %373 = vmatpush1.msra.mxu0 %v340
      %374 = vmatprep.subr.mxu0 0.0
      %375 = vmatpush1.msra.mxu0 %v339
      %376 = vmatprep.subr.mxu0 0.0
      %377 = vmatpush1.msra.mxu0 %v338
      %378 = vmatprep.subr.mxu0 0.0
      %379 = vmatpush1.msra.mxu0 %v337
      %380 = vmatprep.subr.mxu0 0.0
      %381 = vmatpush1.msra.mxu0 %v336
      %382 = vmatprep.subr.mxu0 0.0
      %383 = vmatpush1.msra.mxu0 %v335
      %384 = vmatprep.subr.mxu0 0.0
      %385 = vmatpush1.msra.mxu0 %v334
      %386 = vmatprep.subr.mxu0 0.0
      %387 = vmatpush1.msra.mxu0 %v333
      %388 = vmatprep.subr.mxu0 0.0
      %389 = vmatpush2.msra.mxu0 0.0
      %390 = vmatprep.subr.mxu0 0.0
      %391 = vmatpush2.msra.mxu0 0.0
      %392 = vmatprep.subr.mxu0 0.0
      %393 = vmatpush2.msra.mxu0 0.0
      %394 = vmatprep.subr.mxu0 0.0
      %395 = vmatpush2.msra.mxu0 0.0
      %396 = vmatprep.subr.mxu0 0.0
      %397 = vmatpush2.msra.mxu0 0.0
      %398 = vmatprep.subr.mxu0 0.0
      %399 = vmatpush2.msra.mxu0 0.0
      %400 = vmatprep.subr.mxu0 0.0
      %401 = vmatpush2.msra.mxu0 0.0
      %402 = vmatprep.subr.mxu0 0.0
      %403 = vmatpush2.msra.mxu0 0.0
      %404 = vmatprep.subr.mxu0 0.0
      %405 = vmatpush2.msra.mxu0 0.0
      %406 = vmatprep.subr.mxu0 0.0
      %407 = vmatpush2.msra.mxu0 0.0
      %408 = vmatprep.subr.mxu0 0.0
      %409 = vmatpush2.msra.mxu0 0.0
      %410 = vmatprep.subr.mxu0 0.0
      %411 = vmatpush2.msra.mxu0 0.0
      %412 = vmatprep.subr.mxu0 0.0
      %413 = vmatpush2.msra.mxu0 0.0
      %414 = vmatprep.subr.mxu0 0.0
      %415 = vmatpush2.msra.mxu0 0.0
      %416 = vmatprep.subr.mxu0 0.0
      %417 = vmatpush2.msra.mxu0 0.0
      %418 = vmatprep.subr.mxu0 0.0
      %419 = vmatpush2.msra.mxu0 0.0
      %420 = vmatprep.mubr.f32.mxu0 0.0
      %421 = vmatmul.mubr.f32.gmra.mxu0 %v331
      %v422 = vpop.f32.mrf.mxu0
      %v423 = vadd.f32 %v354, %v422
      %v424 = vpop.f32.mrf.mxu0
      %425 = vmatprep.mubr.f32.mxu0 0.0
      %426 = vmatmul.mubr.f32.gmra.mxu0 %v332
      %v427 = vpop.f32.mrf.mxu0
      %v428 = vadd.f32 %v354, %v427
      %v429 = vpop.f32.mrf.mxu0
      %430 = vdwg.mxu0
      %v431 = vmax.f32 %v423, 0.0
      %v432 = vmax.f32 %v428, 0.0
      %v433 = vld [vmem:[%s3] sm:$0xff]
      %v434 = vld [vmem:[%s3 + $0x8] sm:$0xff]
      %v435 = vld [vmem:[%s3 + $0x10] sm:$0xff]
      %v436 = vld [vmem:[%s3 + $0x18] sm:$0xff]
      %v437 = vld [vmem:[%s3 + $0x20] sm:$0xff]
      %v438 = vld [vmem:[%s3 + $0x28] sm:$0xff]
      %v439 = vld [vmem:[%s3 + $0x30] sm:$0xff]
      %v440 = vld [vmem:[%s3 + $0x38] sm:$0xff]
      %v441 = vld [vmem:[%s4] sm:$0x1]
      %v443 = vlaneseq
      %v444 = vshrl.u32 %v443, 7
      %v445 = vsub.s32 0, %v444
      %v446 = vrot.slane %v441, %v445
      %vm448 = vcmask 523264
      %v450 = vsel %vm448, %v431, 0
      %v453 = vsel %vm448, %v432, 0
      %455 = vmatprep.subr.mxu0 0.0
      %456 = vmatpush1.msra.mxu0 0.0
      %457 = vmatprep.subr.mxu0 0.0
      %458 = vmatpush1.msra.mxu0 0.0
      %459 = vmatprep.subr.mxu0 0.0
      %460 = vmatpush1.msra.mxu0 0.0
      %461 = vmatprep.subr.mxu0 0.0
      %462 = vmatpush1.msra.mxu0 0.0
      %463 = vmatprep.subr.mxu0 0.0
      %464 = vmatpush1.msra.mxu0 0.0
      %465 = vmatprep.subr.mxu0 0.0
      %466 = vmatpush1.msra.mxu0 0.0
      %467 = vmatprep.subr.mxu0 0.0
      %468 = vmatpush1.msra.mxu0 0.0
      %469 = vmatprep.subr.mxu0 0.0
      %470 = vmatpush1.msra.mxu0 0.0
      %471 = vmatprep.subr.mxu0 0.0
      %472 = vmatpush1.msra.mxu0 %v440
      %473 = vmatprep.subr.mxu0 0.0
      %474 = vmatpush1.msra.mxu0 %v439
      %475 = vmatprep.subr.mxu0 0.0
      %476 = vmatpush1.msra.mxu0 %v438
      %477 = vmatprep.subr.mxu0 0.0
      %478 = vmatpush1.msra.mxu0 %v437
      %479 = vmatprep.subr.mxu0 0.0
      %480 = vmatpush1.msra.mxu0 %v436
      %481 = vmatprep.subr.mxu0 0.0
      %482 = vmatpush1.msra.mxu0 %v435
      %483 = vmatprep.subr.mxu0 0.0
      %484 = vmatpush1.msra.mxu0 %v434
      %485 = vmatprep.subr.mxu0 0.0
      %486 = vmatpush1.msra.mxu0 %v433
      %487 = vmatprep.subr.mxu0 0.0
      %488 = vmatpush2.msra.mxu0 0.0
      %489 = vmatprep.subr.mxu0 0.0
      %490 = vmatpush2.msra.mxu0 0.0
      %491 = vmatprep.subr.mxu0 0.0
      %492 = vmatpush2.msra.mxu0 0.0
      %493 = vmatprep.subr.mxu0 0.0
      %494 = vmatpush2.msra.mxu0 0.0
      %495 = vmatprep.subr.mxu0 0.0
      %496 = vmatpush2.msra.mxu0 0.0
      %497 = vmatprep.subr.mxu0 0.0
      %498 = vmatpush2.msra.mxu0 0.0
      %499 = vmatprep.subr.mxu0 0.0
      %500 = vmatpush2.msra.mxu0 0.0
      %501 = vmatprep.subr.mxu0 0.0
      %502 = vmatpush2.msra.mxu0 0.0
      %503 = vmatprep.subr.mxu0 0.0
      %504 = vmatpush2.msra.mxu0 0.0
      %505 = vmatprep.subr.mxu0 0.0
      %506 = vmatpush2.msra.mxu0 0.0
      %507 = vmatprep.subr.mxu0 0.0
      %508 = vmatpush2.msra.mxu0 0.0
      %509 = vmatprep.subr.mxu0 0.0
      %510 = vmatpush2.msra.mxu0 0.0
      %511 = vmatprep.subr.mxu0 0.0
      %512 = vmatpush2.msra.mxu0 0.0
      %513 = vmatprep.subr.mxu0 0.0
      %514 = vmatpush2.msra.mxu0 0.0
      %515 = vmatprep.subr.mxu0 0.0
      %516 = vmatpush2.msra.mxu0 0.0
      %517 = vmatprep.subr.mxu0 0.0
      %518 = vmatpush2.msra.mxu0 0.0
      %519 = vmatprep.mubr.f32.mxu0 0.0
      %520 = vmatmul.mubr.f32.gmra.mxu0 %v450
      %v521 = vpop.f32.mrf.mxu0
      %v522 = vadd.f32 %v446, %v521
      %v523 = vpop.f32.mrf.mxu0
      %524 = vmatprep.mubr.f32.mxu0 0.0
      %525 = vmatmul.mubr.f32.gmra.mxu0 %v453
      %v526 = vpop.f32.mrf.mxu0
      %v527 = vadd.f32 %v446, %v526
      %v528 = vpop.f32.mrf.mxu0
      %529 = vdwg.mxu0
      %v530 = vmax.f32 %v522, 0.0
      %v531 = vmax.f32 %v527, 0.0
      %v532 = vld [vmem:[%s5] sm:$0xff]
      %v533 = vld [vmem:[%s5 + $0x8] sm:$0xff]
      %v534 = vld [vmem:[%s5 + $0x10] sm:$0xff]
      %v535 = vld [vmem:[%s5 + $0x18] sm:$0xff]
      %v536 = vld [vmem:[%s5 + $0x20] sm:$0xff]
      %v537 = vld [vmem:[%s5 + $0x28] sm:$0xff]
      %v538 = vld [vmem:[%s5 + $0x30] sm:$0xff]
      %v539 = vld [vmem:[%s5 + $0x38] sm:$0xff]
      %v540 = vld [vmem:[%s5 + $0x40] sm:$0xff]
      %v541 = vld [vmem:[%s5 + $0x48] sm:$0xff]
      %v542 = vld [vmem:[%s5 + $0x50] sm:$0xff]
      %v543 = vld [vmem:[%s5 + $0x58] sm:$0xff]
      %v544 = vld [vmem:[%s5 + $0x60] sm:$0xff]
      %v545 = vld [vmem:[%s5 + $0x68] sm:$0xff]
      %v546 = vld [vmem:[%s5 + $0x70] sm:$0xff]
      %v547 = vld [vmem:[%s5 + $0x78] sm:$0xff]
      %v548 = vld [vmem:[%s6] sm:$0x1]
      %v550 = vlaneseq
      %v551 = vshrl.u32 %v550, 7
      %v552 = vsub.s32 0, %v551
      %v553 = vrot.slane %v548, %v552
      %555 = vmatprep.subr.mxu0 0.0
      %556 = vmatpush1.msra.mxu0 %v547
      %557 = vmatprep.subr.mxu0 0.0
      %558 = vmatpush1.msra.mxu0 %v546
      %559 = vmatprep.subr.mxu0 0.0
      %560 = vmatpush1.msra.mxu0 %v545
      %561 = vmatprep.subr.mxu0 0.0
      %562 = vmatpush1.msra.mxu0 %v544
      %563 = vmatprep.subr.mxu0 0.0
      %564 = vmatpush1.msra.mxu0 %v543
      %565 = vmatprep.subr.mxu0 0.0
      %566 = vmatpush1.msra.mxu0 %v542
      %567 = vmatprep.subr.mxu0 0.0
      %568 = vmatpush1.msra.mxu0 %v541
      %569 = vmatprep.subr.mxu0 0.0
      %570 = vmatpush1.msra.mxu0 %v540
      %571 = vmatprep.subr.mxu0 0.0
      %572 = vmatpush1.msra.mxu0 %v539
      %573 = vmatprep.subr.mxu0 0.0
      %574 = vmatpush1.msra.mxu0 %v538
      %575 = vmatprep.subr.mxu0 0.0
      %576 = vmatpush1.msra.mxu0 %v537
      %577 = vmatprep.subr.mxu0 0.0
      %578 = vmatpush1.msra.mxu0 %v536
      %579 = vmatprep.subr.mxu0 0.0
      %580 = vmatpush1.msra.mxu0 %v535
      %581 = vmatprep.subr.mxu0 0.0
      %582 = vmatpush1.msra.mxu0 %v534
      %583 = vmatprep.subr.mxu0 0.0
      %584 = vmatpush1.msra.mxu0 %v533
      %585 = vmatprep.subr.mxu0 0.0
      %586 = vmatpush1.msra.mxu0 %v532
      %587 = vmatprep.subr.mxu0 0.0
      %588 = vmatpush2.msra.mxu0 0.0
      %589 = vmatprep.subr.mxu0 0.0
      %590 = vmatpush2.msra.mxu0 0.0
      %591 = vmatprep.subr.mxu0 0.0
      %592 = vmatpush2.msra.mxu0 0.0
      %593 = vmatprep.subr.mxu0 0.0
      %594 = vmatpush2.msra.mxu0 0.0
      %595 = vmatprep.subr.mxu0 0.0
      %596 = vmatpush2.msra.mxu0 0.0
      %597 = vmatprep.subr.mxu0 0.0
      %598 = vmatpush2.msra.mxu0 0.0
      %599 = vmatprep.subr.mxu0 0.0
      %600 = vmatpush2.msra.mxu0 0.0
      %601 = vmatprep.subr.mxu0 0.0
      %602 = vmatpush2.msra.mxu0 0.0
      %603 = vmatprep.subr.mxu0 0.0
      %604 = vmatpush2.msra.mxu0 0.0
      %605 = vmatprep.subr.mxu0 0.0
      %606 = vmatpush2.msra.mxu0 0.0
      %607 = vmatprep.subr.mxu0 0.0
      %608 = vmatpush2.msra.mxu0 0.0
      %609 = vmatprep.subr.mxu0 0.0
      %610 = vmatpush2.msra.mxu0 0.0
      %611 = vmatprep.subr.mxu0 0.0
      %612 = vmatpush2.msra.mxu0 0.0
      %613 = vmatprep.subr.mxu0 0.0
      %614 = vmatpush2.msra.mxu0 0.0
      %615 = vmatprep.subr.mxu0 0.0
      %616 = vmatpush2.msra.mxu0 0.0
      %617 = vmatprep.subr.mxu0 0.0
      %618 = vmatpush2.msra.mxu0 0.0
      %619 = vmatprep.mubr.f32.mxu0 0.0
      %620 = vmatmul.mubr.f32.gmra.mxu0 %v530
      %v621 = vpop.f32.mrf.mxu0
      %v622 = vadd.f32 %v553, %v621
      %v623 = vpop.f32.mrf.mxu0
      %624 = vmatprep.mubr.f32.mxu0 0.0
      %625 = vmatmul.mubr.f32.gmra.mxu0 %v531
      %v626 = vpop.f32.mrf.mxu0
      %v627 = vadd.f32 %v553, %v626
      %v628 = vpop.f32.mrf.mxu0
      %629 = vdwg.mxu0
      %v630 = vmax.f32 %v622, %v627
      %v631 = vrot.slane %v630, 4
      %v632 = vmax.f32 %v630, %v631
      %v633 = vrot.slane %v632, 2
      %v634 = vmax.f32 %v632, %v633
      %v635 = vrot.slane %v634, 1
      %v636 = vmax.f32 %v634, %v635
      %v637 = vsub.f32 %v622, %v636
      %v638 = vsub.f32 %v627, %v636
      %v639 = vmul.f32 %v637, 1.442695
      %v640 = vpow.pop %v639
      %v641 = vmul.f32 %v638, 1.442695
      %v642 = vpow.pop %v641
      %v643 = vadd.f32 %v640, %v642
      %v644 = vrot.slane %v643, 4
      %v645 = vadd.f32 %v643, %v644
      %v646 = vrot.slane %v645, 2
      %v647 = vadd.f32 %v645, %v646
      %v648 = vrot.slane %v647, 1
      %v649 = vadd.f32 %v647, %v648
      %v650 = vrcp.pop %v649
      %v651 = vmul.f32 %v640, %v650
      %v652 = vmul.f32 %v642, %v650
      %653 = vxpose.xlu0.b32.start [1/16] %v331, 128
      %654 = vxpose.xlu0.b32.cont [2/16] %v332, 128
      %655 = vxpose.xlu0.b32.cont [3/16] 0.0, 128
      %656 = vxpose.xlu0.b32.cont [4/16] 0.0, 128
      %657 = vxpose.xlu0.b32.cont [5/16] 0.0, 128
      %658 = vxpose.xlu0.b32.cont [6/16] 0.0, 128
      %659 = vxpose.xlu0.b32.cont [7/16] 0.0, 128
      %660 = vxpose.xlu0.b32.cont [8/16] 0.0, 128
      %661 = vxpose.xlu0.b32.cont [9/16] 0.0, 128
      %662 = vxpose.xlu0.b32.cont [10/16] 0.0, 128
      %663 = vxpose.xlu0.b32.cont [11/16] 0.0, 128
      %664 = vxpose.xlu0.b32.cont [12/16] 0.0, 128
      %665 = vxpose.xlu0.b32.cont [13/16] 0.0, 128
      %666 = vxpose.xlu0.b32.cont [14/16] 0.0, 128
      %667 = vxpose.xlu0.b32.cont [15/16] 0.0, 128
      %668 = vxpose.xlu0.b32.end [16/16] 0.0, 128
      %v669 = vpop.trf.xlu0
      %v670 = vpop.trf.xlu0
      %v671 = vpop.trf.xlu0
      %v672 = vpop.trf.xlu0
      %v673 = vpop.trf.xlu0
      %v674 = vpop.trf.xlu0
      %v675 = vpop.trf.xlu0
      %v676 = vpop.trf.xlu0
      %v677 = vpop.trf.xlu0
      %v678 = vpop.trf.xlu0
      %v679 = vpop.trf.xlu0
      %v680 = vpop.trf.xlu0
      %v681 = vpop.trf.xlu0
      %v682 = vpop.trf.xlu0
      %v683 = vpop.trf.xlu0
      %v684 = vpop.trf.xlu0
      %vm685 = vcmask 130048
      %v687 = vsel %vm685, %v669, 0
      %v690 = vsel %vm685, %v670, 0
      %v693 = vsel %vm685, %v671, 0
      %v696 = vsel %vm685, %v672, 0
      %v699 = vsel %vm685, %v673, 0
      %v702 = vsel %vm685, %v674, 0
      %v705 = vsel %vm685, %v675, 0
      %v708 = vsel %vm685, %v676, 0
      %v711 = vsel %vm685, %v677, 0
      %v714 = vsel %vm685, %v678, 0
      %v717 = vsel %vm685, %v679, 0
      %v720 = vsel %vm685, %v680, 0
      %v723 = vsel %vm685, %v681, 0
      %v726 = vsel %vm685, %v682, 0
      %v729 = vsel %vm685, %v683, 0
      %v732 = vsel %vm685, %v684, 0
      %734 = vmatprep.subr.mxu0 0.0
      %735 = vmatpush1.msra.mxu0 0.0
      %736 = vmatprep.subr.mxu0 0.0
      %737 = vmatpush1.msra.mxu0 0.0
      %738 = vmatprep.subr.mxu0 0.0
      %739 = vmatpush1.msra.mxu0 0.0
      %740 = vmatprep.subr.mxu0 0.0
      %741 = vmatpush1.msra.mxu0 0.0
      %742 = vmatprep.subr.mxu0 0.0
      %743 = vmatpush1.msra.mxu0 0.0
      %744 = vmatprep.subr.mxu0 0.0
      %745 = vmatpush1.msra.mxu0 0.0
      %746 = vmatprep.subr.mxu0 0.0
      %747 = vmatpush1.msra.mxu0 0.0
      %748 = vmatprep.subr.mxu0 0.0
      %749 = vmatpush1.msra.mxu0 0.0
      %750 = vmatprep.subr.mxu0 0.0
      %751 = vmatpush1.msra.mxu0 0.0
      %752 = vmatprep.subr.mxu0 0.0
      %753 = vmatpush1.msra.mxu0 0.0
      %754 = vmatprep.subr.mxu0 0.0
      %755 = vmatpush1.msra.mxu0 0.0
      %756 = vmatprep.subr.mxu0 0.0
      %757 = vmatpush1.msra.mxu0 0.0
      %758 = vmatprep.subr.mxu0 0.0
      %759 = vmatpush1.msra.mxu0 0.0
      %760 = vmatprep.subr.mxu0 0.0
      %761 = vmatpush1.msra.mxu0 0.0
      %762 = vmatprep.subr.mxu0 0.0
      %763 = vmatpush1.msra.mxu0 %v652
      %764 = vmatprep.subr.mxu0 0.0
      %765 = vmatpush1.msra.mxu0 %v651
      %766 = vmatprep.subr.mxu0 0.0
      %767 = vmatpush2.msra.mxu0 0.0
      %768 = vmatprep.subr.mxu0 0.0
      %769 = vmatpush2.msra.mxu0 0.0
      %770 = vmatprep.subr.mxu0 0.0
      %771 = vmatpush2.msra.mxu0 0.0
      %772 = vmatprep.subr.mxu0 0.0
      %773 = vmatpush2.msra.mxu0 0.0
      %774 = vmatprep.subr.mxu0 0.0
      %775 = vmatpush2.msra.mxu0 0.0
      %776 = vmatprep.subr.mxu0 0.0
      %777 = vmatpush2.msra.mxu0 0.0
      %778 = vmatprep.subr.mxu0 0.0
      %779 = vmatpush2.msra.mxu0 0.0
      %780 = vmatprep.subr.mxu0 0.0
      %781 = vmatpush2.msra.mxu0 0.0
      %782 = vmatprep.subr.mxu0 0.0
      %783 = vmatpush2.msra.mxu0 0.0
      %784 = vmatprep.subr.mxu0 0.0
      %785 = vmatpush2.msra.mxu0 0.0
      %786 = vmatprep.subr.mxu0 0.0
      %787 = vmatpush2.msra.mxu0 0.0
      %788 = vmatprep.subr.mxu0 0.0
      %789 = vmatpush2.msra.mxu0 0.0
      %790 = vmatprep.subr.mxu0 0.0
      %791 = vmatpush2.msra.mxu0 0.0
      %792 = vmatprep.subr.mxu0 0.0
      %793 = vmatpush2.msra.mxu0 0.0
      %794 = vmatprep.subr.mxu0 0.0
      %795 = vmatpush2.msra.mxu0 0.0
      %796 = vmatprep.subr.mxu0 0.0
      %797 = vmatpush2.msra.mxu0 0.0
      %798 = vmatprep.mubr.f32.mxu0 0.0
      %799 = vmatmul.mubr.f32.gmra.mxu0 %v687
      %v800 = vpop.f32.mrf.mxu0
      %v801 = vadd.f32 0.0, %v800
      %v802 = vpop.f32.mrf.mxu0
      %803 = vmatprep.mubr.f32.mxu0 0.0
      %804 = vmatmul.mubr.f32.gmra.mxu0 %v690
      %v805 = vpop.f32.mrf.mxu0
      %v806 = vadd.f32 0.0, %v805
      %v807 = vpop.f32.mrf.mxu0
      %808 = vmatprep.mubr.f32.mxu0 0.0
      %809 = vmatmul.mubr.f32.gmra.mxu0 %v693
      %v810 = vpop.f32.mrf.mxu0
      %v811 = vadd.f32 0.0, %v810
      %v812 = vpop.f32.mrf.mxu0
      %813 = vmatprep.mubr.f32.mxu0 0.0
      %814 = vmatmul.mubr.f32.gmra.mxu0 %v696
      %v815 = vpop.f32.mrf.mxu0
      %v816 = vadd.f32 0.0, %v815
      %v817 = vpop.f32.mrf.mxu0
      %818 = vmatprep.mubr.f32.mxu0 0.0
      %819 = vmatmul.mubr.f32.gmra.mxu0 %v699
      %v820 = vpop.f32.mrf.mxu0
      %v821 = vadd.f32 0.0, %v820
      %v822 = vpop.f32.mrf.mxu0
      %823 = vmatprep.mubr.f32.mxu0 0.0
      %824 = vmatmul.mubr.f32.gmra.mxu0 %v702
      %v825 = vpop.f32.mrf.mxu0
      %v826 = vadd.f32 0.0, %v825
      %v827 = vpop.f32.mrf.mxu0
      %828 = vmatprep.mubr.f32.mxu0 0.0
      %829 = vmatmul.mubr.f32.gmra.mxu0 %v705
      %v830 = vpop.f32.mrf.mxu0
      %v831 = vadd.f32 0.0, %v830
      %v832 = vpop.f32.mrf.mxu0
      %833 = vmatprep.mubr.f32.mxu0 0.0
      %834 = vmatmul.mubr.f32.gmra.mxu0 %v708
      %v835 = vpop.f32.mrf.mxu0
      %v836 = vadd.f32 0.0, %v835
      %v837 = vpop.f32.mrf.mxu0
      %838 = vmatprep.mubr.f32.mxu0 0.0
      %839 = vmatmul.mubr.f32.gmra.mxu0 %v711
      %v840 = vpop.f32.mrf.mxu0
      %v841 = vadd.f32 0.0, %v840
      %v842 = vpop.f32.mrf.mxu0
      %843 = vmatprep.mubr.f32.mxu0 0.0
      %844 = vmatmul.mubr.f32.gmra.mxu0 %v714
      %v845 = vpop.f32.mrf.mxu0
      %v846 = vadd.f32 0.0, %v845
      %v847 = vpop.f32.mrf.mxu0
      %848 = vmatprep.mubr.f32.mxu0 0.0
      %849 = vmatmul.mubr.f32.gmra.mxu0 %v717
      %v850 = vpop.f32.mrf.mxu0
      %v851 = vadd.f32 0.0, %v850
      %v852 = vpop.f32.mrf.mxu0
      %853 = vmatprep.mubr.f32.mxu0 0.0
      %854 = vmatmul.mubr.f32.gmra.mxu0 %v720
      %v855 = vpop.f32.mrf.mxu0
      %v856 = vadd.f32 0.0, %v855
      %v857 = vpop.f32.mrf.mxu0
      %858 = vmatprep.mubr.f32.mxu0 0.0
      %859 = vmatmul.mubr.f32.gmra.mxu0 %v723
      %v860 = vpop.f32.mrf.mxu0
      %v861 = vadd.f32 0.0, %v860
      %v862 = vpop.f32.mrf.mxu0
      %863 = vmatprep.mubr.f32.mxu0 0.0
      %864 = vmatmul.mubr.f32.gmra.mxu0 %v726
      %v865 = vpop.f32.mrf.mxu0
      %v866 = vadd.f32 0.0, %v865
      %v867 = vpop.f32.mrf.mxu0
      %868 = vmatprep.mubr.f32.mxu0 0.0
      %869 = vmatmul.mubr.f32.gmra.mxu0 %v729
      %v870 = vpop.f32.mrf.mxu0
      %v871 = vadd.f32 0.0, %v870
      %v872 = vpop.f32.mrf.mxu0
      %873 = vmatprep.mubr.f32.mxu0 0.0
      %874 = vmatmul.mubr.f32.gmra.mxu0 %v732
      %v875 = vpop.f32.mrf.mxu0
      %v876 = vadd.f32 0.0, %v875
      %v877 = vpop.f32.mrf.mxu0
      %878 = vdwg.mxu0
      %v879 = vld [vmem:[%s7] sm:$0x7]
      %v880 = vld [vmem:[%s8] sm:$0x7]
      %882 = vset.pattern.permute.xlu0 0
      %883 = vperm.xlu0 %882, %v880
      %v884 = vpop.permute.xlu0 %883
      %886 = vmatprep.subr.mxu0 0.0
      %887 = vmatpush1.msra.mxu0 %v876
      %888 = vmatprep.subr.mxu0 0.0
      %889 = vmatpush1.msra.mxu0 %v871
      %890 = vmatprep.subr.mxu0 0.0
      %891 = vmatpush1.msra.mxu0 %v866
      %892 = vmatprep.subr.mxu0 0.0
      %893 = vmatpush1.msra.mxu0 %v861
      %894 = vmatprep.subr.mxu0 0.0
      %895 = vmatpush1.msra.mxu0 %v856
      %896 = vmatprep.subr.mxu0 0.0
      %897 = vmatpush1.msra.mxu0 %v851
      %898 = vmatprep.subr.mxu0 0.0
      %899 = vmatpush1.msra.mxu0 %v846
      %900 = vmatprep.subr.mxu0 0.0
      %901 = vmatpush1.msra.mxu0 %v841
      %902 = vmatprep.subr.mxu0 0.0
      %903 = vmatpush1.msra.mxu0 %v836
      %904 = vmatprep.subr.mxu0 0.0
      %905 = vmatpush1.msra.mxu0 %v831
      %906 = vmatprep.subr.mxu0 0.0
      %907 = vmatpush1.msra.mxu0 %v826
      %908 = vmatprep.subr.mxu0 0.0
      %909 = vmatpush1.msra.mxu0 %v821
      %910 = vmatprep.subr.mxu0 0.0
      %911 = vmatpush1.msra.mxu0 %v816
      %912 = vmatprep.subr.mxu0 0.0
      %913 = vmatpush1.msra.mxu0 %v811
      %914 = vmatprep.subr.mxu0 0.0
      %915 = vmatpush1.msra.mxu0 %v806
      %916 = vmatprep.subr.mxu0 0.0
      %917 = vmatpush1.msra.mxu0 %v801
      %918 = vmatprep.subr.mxu0 0.0
      %919 = vmatpush2.msra.mxu0 0.0
      %920 = vmatprep.subr.mxu0 0.0
      %921 = vmatpush2.msra.mxu0 0.0
      %922 = vmatprep.subr.mxu0 0.0
      %923 = vmatpush2.msra.mxu0 0.0
      %924 = vmatprep.subr.mxu0 0.0
      %925 = vmatpush2.msra.mxu0 0.0
      %926 = vmatprep.subr.mxu0 0.0
      %927 = vmatpush2.msra.mxu0 0.0
      %928 = vmatprep.subr.mxu0 0.0
      %929 = vmatpush2.msra.mxu0 0.0
      %930 = vmatprep.subr.mxu0 0.0
      %931 = vmatpush2.msra.mxu0 0.0
      %932 = vmatprep.subr.mxu0 0.0
      %933 = vmatpush2.msra.mxu0 0.0
      %934 = vmatprep.subr.mxu0 0.0
      %935 = vmatpush2.msra.mxu0 0.0
      %936 = vmatprep.subr.mxu0 0.0
      %937 = vmatpush2.msra.mxu0 0.0
      %938 = vmatprep.subr.mxu0 0.0
      %939 = vmatpush2.msra.mxu0 0.0
      %940 = vmatprep.subr.mxu0 0.0
      %941 = vmatpush2.msra.mxu0 0.0
      %942 = vmatprep.subr.mxu0 0.0
      %943 = vmatpush2.msra.mxu0 0.0
      %944 = vmatprep.subr.mxu0 0.0
      %945 = vmatpush2.msra.mxu0 0.0
      %946 = vmatprep.subr.mxu0 0.0
      %947 = vmatpush2.msra.mxu0 0.0
      %948 = vmatprep.subr.mxu0 0.0
      %949 = vmatpush2.msra.mxu0 0.0
      %950 = vmatprep.mubr.f32.mxu0 0.0
      %951 = vmatmul.mubr.f32.gmra.mxu0 %v879
      %v952 = vpop.f32.mrf.mxu0
      %v953 = vadd.f32 %v884, %v952
      %v954 = vpop.f32.mrf.mxu0
      %955 = vdwg.mxu0
      %956 = vst [vmem:[%s330] sm:$0x7] %v953
      %p957 = scmp.lt.s32.totalorder %s20, 1
      %s958 = scalar_select %p957, %s20, 1
      %s959 = smul.addr %s958, 4
      %s960 = scalar_lea.vmem %s9, %s959
      // Predicated region
      $region57: #{axform_pallas.1} parent=55 // pred_check
        %p961 = pneg %p232
      $region58: #{axform_pallas.1} parent=55 // pred_check_branch
        %963 = sbr.rel (%p961) target = $region60
      $region59: #{axform_pallas.1} parent=55 // pred_region
        _
      $region60: #{axform_pallas.1} parent=55 // pred_fallthru
        _
    $region56: #{axform_pallas.1} parent=5 // pred_fallthru
      _
    %p964 = scmp.le.s32.totalorder 2, %s15
    // Predicated region
    $region61: #{axform_pallas.1} parent=5 // pred_check
      %p965 = pneg %p964
    $region62: #{axform_pallas.1} parent=5 // pred_check_branch
      %967 = sbr.rel (%p965) target = $region64
    $region63: #{axform_pallas.1} parent=5 // pred_region
      %s968 = ssub.s32 %s15, 2
      // Predicated region
      $region65: #{axform_pallas.1} parent=63 // pred_check
        %p969 = pneg %p238
      $region66: #{axform_pallas.1} parent=63 // pred_check_branch
        %971 = sbr.rel (%p969) target = $region68
      $region67: #{axform_pallas.1} parent=63 // pred_region
        %p972 = scmp.lt.s32.totalorder %s21, 1
        %s973 = scalar_select %p972, %s21, 1
        %s974 = smul.addr %s973, 4
        %s975 = scalar_lea.vmem %s9, %s974
      $region68: #{axform_pallas.1} parent=63 // pred_fallthru
        _
    $region64: #{axform_pallas.1} parent=5 // pred_fallthru
      _
  $region6: #{axform_pallas.1} parent=0 // loop_footer
    %s19 = sadd.s32 1, %s15
  $region7: #{axform_pallas.1} parent=0 // loop_footer_branch
    %14 = sbr.rel target = $region3
  $region8: #{axform_pallas.1} parent=0 // loop_exit
    _

</llo_original>
